<compile_context>
chip_gen: v7x
topology: tpu7x:2x2x1
jax: 0.10.0
libtpu: 0.0.40
codegen_flags: <defaults>
</compile_context>

<pallas_src>
import functools

import jax
import jax.numpy as jnp
import numpy as np
from jax import lax
from jax.experimental import pallas as pl
from jax.experimental.pallas import tpu as pltpu


def _layer_norm_f32(y, gamma, beta, eps):
    # y: (rows, d_model) f32; gamma/beta: (1, d_model) f32. Biased variance,
    # matching nn.LayerNorm.
    mean = jnp.mean(y, axis=-1, keepdims=True)
    diff = y - mean
    var = jnp.mean(diff * diff, axis=-1, keepdims=True)
    return diff * lax.rsqrt(var + eps) * gamma + beta


def _mha_kernel(x_ref, wqkv_ref, bqkv_ref, wo_ref, gamma_ref, beta_ref, o_ref,
                *, n_head, d_head, scale, pre_lnorm, eps, q_tile, mxu_dtype):
    T = x_ref.shape[1]
    NHD = n_head * d_head

    x = x_ref[0].astype(jnp.float32)             # (T, D)
    gamma = gamma_ref[...].astype(jnp.float32)   # (1, D)
    beta = beta_ref[...].astype(jnp.float32)     # (1, D)

    residual = x
    if pre_lnorm:
        x = _layer_norm_f32(x, gamma, beta, eps)

    # Fused QKV projection on the MXU: bf16 operands, f32 accumulation.
    qkv = jnp.dot(x.astype(mxu_dtype), wqkv_ref[...],
                  preferred_element_type=jnp.float32)
    qkv = qkv + bqkv_ref[...]                    # (T, 3*NHD) f32

    wo = wo_ref[...]                             # (NHD, D) mxu_dtype

    # Per-head K / V slices (contiguous d_head columns, no 128-padding), hoisted
    # out of the query-tile loop since every tile attends to the full sequence.
    k_heads = [qkv[:, NHD + h * d_head:NHD + (h + 1) * d_head].astype(mxu_dtype)
               for h in range(n_head)]
    v_heads = [qkv[:, 2 * NHD + h * d_head:2 * NHD + (h + 1) * d_head].astype(mxu_dtype)
               for h in range(n_head)]

    # Query-tile loop (static trip count): only a (tq, T) score block is live
    # at a time; each tile is projected, normalised and stored immediately.
    for q0 in range(0, T, q_tile):
        q1 = min(q0 + q_tile, T)
        av_heads = []
        for h in range(n_head):
            q_h = qkv[q0:q1, h * d_head:(h + 1) * d_head].astype(mxu_dtype)
            score = jnp.einsum("qd,kd->qk", q_h, k_heads[h],
                               preferred_element_type=jnp.float32) * scale  # (tq, T) f32
            # No key mask needed: the kernel sees the exact sequence length.
            m = jnp.max(score, axis=-1, keepdims=True)
            p = jnp.exp(score - m)                                          # f32
            denom = jnp.sum(p, axis=-1, keepdims=True)
            av = jnp.dot(p.astype(mxu_dtype), v_heads[h],
                         preferred_element_type=jnp.float32)                # (tq, d_head)
            # Deferred softmax normalisation (EUP reciprocal, own issue slot).
            av_heads.append(av * pl.reciprocal(denom, approx=True))
        av_tile = jnp.concatenate(av_heads, axis=-1)                        # (tq, NHD) f32
        attn_out = jnp.dot(av_tile.astype(mxu_dtype), wo,
                           preferred_element_type=jnp.float32)              # (tq, D) f32
        y = residual[q0:q1, :] + attn_out
        o_ref[0, q0:q1, :] = _layer_norm_f32(y, gamma, beta, eps).astype(o_ref.dtype)


def multi_head_attn(inp, params, *, n_head, d_head, pre_lnorm=False, eps=1e-5,
                    q_tile=256, mxu_dtype=jnp.bfloat16):
    """inp: [B, T, d_model]; params: dict with w_qkv (3*NH*DH, d_model),
    b_qkv (3*NH*DH,), w_o (d_model, NH*DH), gamma (d_model,), beta (d_model,).
    Returns [B, T, d_model] (same semantics as MultiHeadAttn.forward in eval)."""
    B, T, d_model = inp.shape
    NHD = n_head * d_head
    w_qkv, b_qkv = params["w_qkv"], params["b_qkv"]
    w_o, gamma, beta = params["w_o"], params["gamma"], params["beta"]

    # Weight layouts for x @ W; MXU operands stored in mxu_dtype (bf16 halves
    # resident weight VMEM), bias / LN params kept in f32.
    wqkv_t = w_qkv.T.astype(mxu_dtype)                        # (d_model, 3*NHD)
    bqkv_r = b_qkv.reshape(1, 3 * NHD).astype(jnp.float32)    # (1, 3*NHD)
    wo_t = w_o.T.astype(mxu_dtype)                            # (NHD, d_model)
    gamma_r = gamma.reshape(1, d_model).astype(jnp.float32)
    beta_r = beta.reshape(1, d_model).astype(jnp.float32)

    tq = max(1, min(q_tile, T))

    kernel = functools.partial(
        _mha_kernel, n_head=n_head, d_head=d_head, scale=1.0 / (d_head ** 0.5),
        pre_lnorm=pre_lnorm, eps=eps, q_tile=tq, mxu_dtype=mxu_dtype)

    # Cost estimate on the true (unpadded) shapes.
    flops = 2 * B * (T * d_model * 3 * NHD            # QKV projection
                     + 2 * n_head * T * T * d_head    # scores + p@v
                     + T * NHD * d_model)             # output projection
    itemsize_in = jnp.dtype(inp.dtype).itemsize
    itemsize_mxu = jnp.dtype(mxu_dtype).itemsize
    cost = pl.CostEstimate(
        flops=flops,
        transcendentals=B * n_head * T * T,
        bytes_accessed=(itemsize_in * B * T * d_model * 2
                        + itemsize_mxu * (d_model * 3 * NHD + NHD * d_model)
                        + 4 * (3 * NHD + 3 * d_model)))

    # Scoped-VMEM budget for the actual live set (double-buffered activation
    # blocks + resident weights + f32 intermediates), capped at v7x's 64 MiB.
    vmem_est = (2 * 2 * T * d_model * itemsize_in                      # x + out blocks
                + 2 * itemsize_mxu * (d_model * 3 * NHD + NHD * d_model)
                + 4 * (3 * NHD + 3 * d_model)
                + 4 * T * (3 * NHD + d_model)                          # qkv + residual
                + 4 * tq * (n_head * T + NHD + d_model))               # live tile values
    vmem_limit = int(min(max(2 * vmem_est, 8 * 2 ** 20), 64 * 2 ** 20))

    out = pl.pallas_call(
        kernel,
        out_shape=jax.ShapeDtypeStruct((B, T, d_model), inp.dtype),
        grid_spec=pltpu.PrefetchScalarGridSpec(
            num_scalar_prefetch=0,
            grid=(B,),
            in_specs=[
                # block == full array dims everywhere -> exempt from (8,128)
                # tiling rule, no HBM pad/trim round trips.
                pl.BlockSpec((1, T, d_model), lambda b: (b, 0, 0)),      # activations
                pl.BlockSpec((d_model, 3 * NHD), lambda b: (0, 0)),      # W_qkv (resident)
                pl.BlockSpec((1, 3 * NHD), lambda b: (0, 0)),            # b_qkv
                pl.BlockSpec((NHD, d_model), lambda b: (0, 0)),          # W_o (resident)
                pl.BlockSpec((1, d_model), lambda b: (0, 0)),            # gamma
                pl.BlockSpec((1, d_model), lambda b: (0, 0)),            # beta
            ],
            out_specs=pl.BlockSpec((1, T, d_model), lambda b: (b, 0, 0)),
        ),
        compiler_params=pltpu.CompilerParams(
            dimension_semantics=("parallel",),
            vmem_limit_bytes=vmem_limit),
        cost_estimate=cost,
    )(inp, wqkv_t, bqkv_r, wo_t, gamma_r, beta_r)

    return out


# ----------------------------------------------------------------------------
# Pure-numpy reference (float64) replicating the PyTorch forward in eval mode.
# ----------------------------------------------------------------------------
def _ln_ref(y, g, b, eps):
    mean = y.mean(-1, keepdims=True)
    var = y.var(-1, keepdims=True)          # unbiased=False, matches nn.LayerNorm
    return (y - mean) / np.sqrt(var + eps) * g + b


def _reference_numpy(inp, w_qkv, b_qkv, w_o, gamma, beta, n_head, d_head,
                     pre_lnorm=False, eps=1e-5):
    x = np.asarray(inp, np.float64)
    w_qkv = np.asarray(w_qkv, np.float64); b_qkv = np.asarray(b_qkv, np.float64)
    w_o = np.asarray(w_o, np.float64)
    gamma = np.asarray(gamma, np.float64); beta = np.asarray(beta, np.float64)

    residual = x
    if pre_lnorm:
        x = _ln_ref(x, gamma, beta, eps)
    B, T, _ = x.shape
    qkv = x @ w_qkv.T + b_qkv
    q, k, v = np.split(qkv, 3, axis=2)
    q = q.reshape(B, T, n_head, d_head)
    k = k.reshape(B, T, n_head, d_head)
    v = v.reshape(B, T, n_head, d_head)
    scale = 1.0 / d_head ** 0.5
    scores = np.einsum("bqhd,bkhd->bhqk", q, k) * scale
    scores = scores - scores.max(-1, keepdims=True)
    p = np.exp(scores)
    p = p / p.sum(-1, keepdims=True)
    av = np.einsum("bhqk,bkhd->bqhd", p, v).reshape(B, T, n_head * d_head)
    attn_out = av @ w_o.T
    return _ln_ref(residual + attn_out, gamma, beta, eps)


if __name__ == "__main__":
    key = jax.random.PRNGKey(0)
    ks = jax.random.split(key, 6)

    B, T, d_model, n_head, d_head = 2, 8, 32, 2, 16

    inp = jax.random.normal(ks[0], (B, T, d_model), dtype=jnp.float32)
    w_qkv = jax.random.normal(ks[1], (3 * n_head * d_head, d_model),
                              dtype=jnp.float32) / np.sqrt(d_model)
    b_qkv = 0.1 * jax.random.normal(ks[2], (3 * n_head * d_head,), dtype=jnp.float32)
    w_o = jax.random.normal(ks[3], (d_model, n_head * d_head),
                            dtype=jnp.float32) / np.sqrt(n_head * d_head)
    gamma = 1.0 + 0.1 * jax.random.normal(ks[4], (d_model,), dtype=jnp.float32)
    beta = 0.1 * jax.random.normal(ks[5], (d_model,), dtype=jnp.float32)

    params = dict(w_qkv=w_qkv, b_qkv=b_qkv, w_o=w_o, gamma=gamma, beta=beta)

    ref = _reference_numpy(np.array(inp), np.array(w_qkv), np.array(b_qkv),
                           np.array(w_o), np.array(gamma), np.array(beta),
                           n_head, d_head, pre_lnorm=False)

    # Tight numerical check with f32 MXU operands (approx reciprocal included).
    fn_f32 = jax.jit(functools.partial(multi_head_attn, n_head=n_head,
                                       d_head=d_head, pre_lnorm=False,
                                       mxu_dtype=jnp.float32))
    out_f32 = jax.block_until_ready(fn_f32(inp, params))
    assert out_f32.shape == ref.shape, (out_f32.shape, ref.shape)
    np.testing.assert_allclose(np.asarray(out_f32, np.float64), ref,
                               rtol=1e-2, atol=1e-2)

    # Fast path: bf16 MXU operands with f32 accumulation (looser tolerance).
    fn_bf16 = jax.jit(functools.partial(multi_head_attn, n_head=n_head,
                                        d_head=d_head, pre_lnorm=False,
                                        mxu_dtype=jnp.bfloat16))
    out_bf16 = jax.block_until_ready(fn_bf16(inp, params))
    assert out_bf16.shape == ref.shape, (out_bf16.shape, ref.shape)
    np.testing.assert_allclose(np.asarray(out_bf16, np.float64), ref,
                               rtol=1e-1, atol=1e-1)

    print("KERNEL_OK")
</pallas_src>

<mosaic_0001>
module attributes {stable_mosaic.version = 11 : i64} {
  func.func @_mha_kernel(%arg0: i32, %arg1: memref<1x8x32xf32, #tpu.memory_space<vmem>>, %arg2: memref<32x96xf32, #tpu.memory_space<vmem>>, %arg3: memref<1x96xf32, #tpu.memory_space<vmem>>, %arg4: memref<32x32xf32, #tpu.memory_space<vmem>>, %arg5: memref<1x32xf32, #tpu.memory_space<vmem>>, %arg6: memref<1x32xf32, #tpu.memory_space<vmem>>, %arg7: memref<1x8x32xf32, #tpu.memory_space<vmem>>) attributes {dimension_semantics = [#tpu.dimension_semantics<parallel>], iteration_bounds = array<i64: 2>, scalar_prefetch = 0 : i64, scratch_operands = 0 : i64, tpu.core_type = #tpu.core_type<tc>, window_params = [{transform_indices = @transform_0, window_bounds = array<i64: 1, 8, 32>}, {pipeline_mode = #tpu.pipeline_mode<synchronous>, transform_indices = @transform_1, window_bounds = array<i64: 32, 96>}, {pipeline_mode = #tpu.pipeline_mode<synchronous>, transform_indices = @transform_2, window_bounds = array<i64: 1, 96>}, {pipeline_mode = #tpu.pipeline_mode<synchronous>, transform_indices = @transform_3, window_bounds = array<i64: 32, 32>}, {pipeline_mode = #tpu.pipeline_mode<synchronous>, transform_indices = @transform_4, window_bounds = array<i64: 1, 32>}, {pipeline_mode = #tpu.pipeline_mode<synchronous>, transform_indices = @transform_5, window_bounds = array<i64: 1, 32>}, {transform_indices = @transform_6, window_bounds = array<i64: 1, 8, 32>}]} {
    %c0 = arith.constant 0 : index
    %c0_0 = arith.constant 0 : index
    %c0_1 = arith.constant 0 : index
    %0 = vector.load %arg1[%c0, %c0_0, %c0_1] : memref<1x8x32xf32, #tpu.memory_space<vmem>>, vector<1x8x32xf32>
    %1 = vector.shape_cast %0 : vector<1x8x32xf32> to vector<8x32xf32>
    %c0_2 = arith.constant 0 : index
    %c0_3 = arith.constant 0 : index
    %2 = vector.load %arg5[%c0_2, %c0_3] : memref<1x32xf32, #tpu.memory_space<vmem>>, vector<1x32xf32>
    %c0_4 = arith.constant 0 : index
    %c0_5 = arith.constant 0 : index
    %3 = vector.load %arg6[%c0_4, %c0_5] : memref<1x32xf32, #tpu.memory_space<vmem>>, vector<1x32xf32>
    %c0_6 = arith.constant 0 : index
    %c0_7 = arith.constant 0 : index
    %4 = vector.load %arg2[%c0_6, %c0_7] : memref<32x96xf32, #tpu.memory_space<vmem>>, vector<32x96xf32>
    %cst = arith.constant dense<0.000000e+00> : vector<8x96xf32>
    %5 = tpu.matmul %1, %4, %cst {dimension_numbers = #tpu.dot_dimension_numbers<[1], [0], [0], [1], [0, 0, 1, 1], [], []>} : vector<8x32xf32>, vector<32x96xf32>, vector<8x96xf32> -> vector<8x96xf32>
    %c0_8 = arith.constant 0 : index
    %c0_9 = arith.constant 0 : index
    %6 = vector.load %arg3[%c0_8, %c0_9] : memref<1x96xf32, #tpu.memory_space<vmem>>, vector<1x96xf32>
    %7 = vector.broadcast %6 : vector<1x96xf32> to vector<8x96xf32>
    %8 = arith.addf %5, %7 : vector<8x96xf32>
    %c0_10 = arith.constant 0 : index
    %c0_11 = arith.constant 0 : index
    %9 = vector.load %arg4[%c0_10, %c0_11] : memref<32x32xf32, #tpu.memory_space<vmem>>, vector<32x32xf32>
    %10 = vector.extract_strided_slice %8 {offsets = [0, 32], sizes = [8, 16], strides = [1, 1]} : vector<8x96xf32> to vector<8x16xf32>
    %11 = vector.extract_strided_slice %8 {offsets = [0, 48], sizes = [8, 16], strides = [1, 1]} : vector<8x96xf32> to vector<8x16xf32>
    %12 = vector.extract_strided_slice %8 {offsets = [0, 64], sizes = [8, 16], strides = [1, 1]} : vector<8x96xf32> to vector<8x16xf32>
    %13 = vector.extract_strided_slice %8 {offsets = [0, 80], sizes = [8, 16], strides = [1, 1]} : vector<8x96xf32> to vector<8x16xf32>
    %14 = vector.extract_strided_slice %8 {offsets = [0, 0], sizes = [8, 16], strides = [1, 1]} : vector<8x96xf32> to vector<8x16xf32>
    "tpu.trace_start"() <{level = 10 : i32, message = "qd,kd->qk"}> : () -> ()
    %cst_12 = arith.constant dense<0.000000e+00> : vector<8x8xf32>
    %15 = tpu.matmul %14, %10, %cst_12 {dimension_numbers = #tpu.dot_dimension_numbers<[1], [1], [0], [0], [0, 0, 1, 0], [], []>} : vector<8x16xf32>, vector<8x16xf32>, vector<8x8xf32> -> vector<8x8xf32>
    "tpu.trace_stop"() : () -> ()
    %cst_13 = arith.constant 2.500000e-01 : f32
    %16 = vector.broadcast %cst_13 : f32 to vector<8x8xf32>
    %17 = arith.mulf %15, %16 : vector<8x8xf32>
    %cst_14 = arith.constant dense<0xFF800000> : vector<8xf32>
    %18 = vector.multi_reduction <maximumf>, %17, %cst_14 [1] : vector<8x8xf32> to vector<8xf32>
    %19 = vector.shape_cast %18 : vector<8xf32> to vector<8x1xf32>
    %20 = vector.broadcast %19 : vector<8x1xf32> to vector<8x8xf32>
    %21 = arith.subf %17, %20 : vector<8x8xf32>
    %22 = math.exp %21 : vector<8x8xf32>
    %cst_15 = arith.constant dense<0.000000e+00> : vector<8xf32>
    %23 = vector.multi_reduction <add>, %22, %cst_15 [1] : vector<8x8xf32> to vector<8xf32>
    %24 = vector.shape_cast %23 : vector<8xf32> to vector<8x1xf32>
    %cst_16 = arith.constant dense<0.000000e+00> : vector<8x16xf32>
    %25 = tpu.matmul %22, %12, %cst_16 {dimension_numbers = #tpu.dot_dimension_numbers<[1], [0], [0], [1], [0, 0, 1, 1], [], []>} : vector<8x8xf32>, vector<8x16xf32>, vector<8x16xf32> -> vector<8x16xf32>
    %26 = tpu.reciprocal %24 {approx = true} : vector<8x1xf32> -> vector<8x1xf32>
    %27 = vector.broadcast %26 : vector<8x1xf32> to vector<8x16xf32>
    %28 = arith.mulf %25, %27 : vector<8x16xf32>
    %29 = vector.extract_strided_slice %8 {offsets = [0, 16], sizes = [8, 16], strides = [1, 1]} : vector<8x96xf32> to vector<8x16xf32>
    "tpu.trace_start"() <{level = 10 : i32, message = "qd,kd->qk"}> : () -> ()
    %cst_17 = arith.constant dense<0.000000e+00> : vector<8x8xf32>
    %30 = tpu.matmul %29, %11, %cst_17 {dimension_numbers = #tpu.dot_dimension_numbers<[1], [1], [0], [0], [0, 0, 1, 0], [], []>} : vector<8x16xf32>, vector<8x16xf32>, vector<8x8xf32> -> vector<8x8xf32>
    "tpu.trace_stop"() : () -> ()
    %cst_18 = arith.constant 2.500000e-01 : f32
    %31 = vector.broadcast %cst_18 : f32 to vector<8x8xf32>
    %32 = arith.mulf %30, %31 : vector<8x8xf32>
    %cst_19 = arith.constant dense<0xFF800000> : vector<8xf32>
    %33 = vector.multi_reduction <maximumf>, %32, %cst_19 [1] : vector<8x8xf32> to vector<8xf32>
    %34 = vector.shape_cast %33 : vector<8xf32> to vector<8x1xf32>
    %35 = vector.broadcast %34 : vector<8x1xf32> to vector<8x8xf32>
    %36 = arith.subf %32, %35 : vector<8x8xf32>
    %37 = math.exp %36 : vector<8x8xf32>
    %cst_20 = arith.constant dense<0.000000e+00> : vector<8xf32>
    %38 = vector.multi_reduction <add>, %37, %cst_20 [1] : vector<8x8xf32> to vector<8xf32>
    %39 = vector.shape_cast %38 : vector<8xf32> to vector<8x1xf32>
    %cst_21 = arith.constant dense<0.000000e+00> : vector<8x16xf32>
    %40 = tpu.matmul %37, %13, %cst_21 {dimension_numbers = #tpu.dot_dimension_numbers<[1], [0], [0], [1], [0, 0, 1, 1], [], []>} : vector<8x8xf32>, vector<8x16xf32>, vector<8x16xf32> -> vector<8x16xf32>
    %41 = tpu.reciprocal %39 {approx = true} : vector<8x1xf32> -> vector<8x1xf32>
    %42 = vector.broadcast %41 : vector<8x1xf32> to vector<8x16xf32>
    %43 = arith.mulf %40, %42 : vector<8x16xf32>
    %44 = tpu.concatenate %28, %43 in 1 : vector<8x16xf32>, vector<8x16xf32> -> vector<8x32xf32>
    %cst_22 = arith.constant dense<0.000000e+00> : vector<8x32xf32>
    %45 = tpu.matmul %44, %9, %cst_22 {dimension_numbers = #tpu.dot_dimension_numbers<[1], [0], [0], [1], [0, 0, 1, 1], [], []>} : vector<8x32xf32>, vector<32x32xf32>, vector<8x32xf32> -> vector<8x32xf32>
    %46 = arith.addf %1, %45 : vector<8x32xf32>
    %cst_23 = arith.constant dense<0.000000e+00> : vector<8xf32>
    %47 = vector.multi_reduction <add>, %46, %cst_23 [1] : vector<8x32xf32> to vector<8xf32>
    %48 = vector.shape_cast %47 : vector<8xf32> to vector<8x1xf32>
    %cst_24 = arith.constant 3.200000e+01 : f32
    %49 = vector.broadcast %cst_24 : f32 to vector<8x1xf32>
    %50 = arith.divf %48, %49 : vector<8x1xf32>
    %51 = vector.broadcast %50 : vector<8x1xf32> to vector<8x32xf32>
    %52 = arith.subf %46, %51 : vector<8x32xf32>
    %53 = arith.mulf %52, %52 : vector<8x32xf32>
    %cst_25 = arith.constant dense<0.000000e+00> : vector<8xf32>
    %54 = vector.multi_reduction <add>, %53, %cst_25 [1] : vector<8x32xf32> to vector<8xf32>
    %55 = vector.shape_cast %54 : vector<8xf32> to vector<8x1xf32>
    %cst_26 = arith.constant 3.200000e+01 : f32
    %56 = vector.broadcast %cst_26 : f32 to vector<8x1xf32>
    %57 = arith.divf %55, %56 : vector<8x1xf32>
    %cst_27 = arith.constant 9.99999974E-6 : f32
    %58 = vector.broadcast %cst_27 : f32 to vector<8x1xf32>
    %59 = arith.addf %57, %58 : vector<8x1xf32>
    %60 = math.rsqrt %59 : vector<8x1xf32>
    %61 = vector.broadcast %60 : vector<8x1xf32> to vector<8x32xf32>
    %62 = arith.mulf %52, %61 : vector<8x32xf32>
    %63 = vector.broadcast %2 : vector<1x32xf32> to vector<8x32xf32>
    %64 = arith.mulf %62, %63 : vector<8x32xf32>
    %65 = vector.broadcast %3 : vector<1x32xf32> to vector<8x32xf32>
    %66 = arith.addf %64, %65 : vector<8x32xf32>
    %c0_28 = arith.constant 0 : index
    %c0_29 = arith.constant 0 : index
    %c0_30 = arith.constant 0 : index
    %67 = vector.load %arg7[%c0_28, %c0_29, %c0_30] : memref<1x8x32xf32, #tpu.memory_space<vmem>>, vector<1x8x32xf32>
    %68 = vector.shape_cast %67 : vector<1x8x32xf32> to vector<8x32xf32>
    %69 = vector.shape_cast %66 : vector<8x32xf32> to vector<1x8x32xf32>
    tpu.vector_store %arg7[%c0_28, %c0_29, %c0_30], %69 {strides = array<i32>} : memref<1x8x32xf32, #tpu.memory_space<vmem>>, vector<1x8x32xf32>,
    return
  }
  func.func @transform_0(%arg0: i32) -> (i32, i32, i32) {
    %c0_i32 = arith.constant 0 : i32
    %c0_i32_0 = arith.constant 0 : i32
    %c0_i32_1 = arith.constant 0 : i32
    return %arg0, %c0_i32, %c0_i32_0 : i32, i32, i32
  }
  func.func @transform_1(%arg0: i32) -> (i32, i32) {
    %c0_i32 = arith.constant 0 : i32
    %c0_i32_0 = arith.constant 0 : i32
    %c0_i32_1 = arith.constant 0 : i32
    return %c0_i32, %c0_i32_0 : i32, i32
  }
  func.func @transform_2(%arg0: i32) -> (i32, i32) {
    %c0_i32 = arith.constant 0 : i32
    %c0_i32_0 = arith.constant 0 : i32
    %c0_i32_1 = arith.constant 0 : i32
    return %c0_i32, %c0_i32_0 : i32, i32
  }
  func.func @transform_3(%arg0: i32) -> (i32, i32) {
    %c0_i32 = arith.constant 0 : i32
    %c0_i32_0 = arith.constant 0 : i32
    %c0_i32_1 = arith.constant 0 : i32
    return %c0_i32, %c0_i32_0 : i32, i32
  }
  func.func @transform_4(%arg0: i32) -> (i32, i32) {
    %c0_i32 = arith.constant 0 : i32
    %c0_i32_0 = arith.constant 0 : i32
    %c0_i32_1 = arith.constant 0 : i32
    return %c0_i32, %c0_i32_0 : i32, i32
  }
  func.func @transform_5(%arg0: i32) -> (i32, i32) {
    %c0_i32 = arith.constant 0 : i32
    %c0_i32_0 = arith.constant 0 : i32
    %c0_i32_1 = arith.constant 0 : i32
    return %c0_i32, %c0_i32_0 : i32, i32
  }
  func.func @transform_6(%arg0: i32) -> (i32, i32, i32) {
    %c0_i32 = arith.constant 0 : i32
    %c0_i32_0 = arith.constant 0 : i32
    %c0_i32_1 = arith.constant 0 : i32
    return %arg0, %c0_i32, %c0_i32_0 : i32, i32, i32
  }
}

</mosaic_0001>

<llo_original>
// kernel: multi_head_attn.1
$region0: #{multi_head_attn.1}
  #allocation0 [shape = 'u32[]', space=smem, size = 0x4, offset = 0x4, fixed_abs, tag = 'smem constant byte address 0x4 - core index']
  #allocation1 [shape = 'u32[144,128]{1,0:T(1,128)}', space=vmem, size = 0x12000, scoped, tag = 'internal scratch']
  %s0 = inlined_call_operand.vmem [shape: f32[2,8,32], index: 0, kind: input, shape index: {}]
  %s1 = inlined_call_operand.vmem [shape: f32[32,96], index: 1, kind: input, shape index: {}]
  %s2 = inlined_call_operand.vmem [shape: f32[1,96], index: 2, kind: input, shape index: {}]
  %s3 = inlined_call_operand.vmem [shape: f32[32,32], index: 3, kind: input, shape index: {}]
  %s4 = inlined_call_operand.vmem [shape: f32[1,32], index: 4, kind: input, shape index: {}]
  %s5 = inlined_call_operand.vmem [shape: f32[1,32], index: 5, kind: input, shape index: {}]
  %s6 = inlined_call_operand.hbm [shape: f32[2,8,32], index: 6, kind: output, shape index: {}]
  %s7 = sld [smem:[#allocation0]]
  $region57: #{multi_head_attn.1} parent=0
    _
  %s9 = ssub.s32 1, %s7
  %s10 = scalar_select 0, %s9, %s7
  $region1: #{multi_head_attn.1} parent=0
    #allocation2 [shape = 'u8[8192]{0}', space=vmem, size = 0x2000, scoped, tag = 'output window, operand 0']
    #allocation3 [shape = 's32[2]{0}', space=sflag, size = 0x8, scoped, tag = 'scoped memory for multi_head_attn.1']
    %11 = vsyncpa [#allocation3], 0
    %s12 = scalar_lea.sflag [#allocation3], 1
    %13 = vsyncpa %s12, 0
    loop: start=0, step=1, limit=4
    $region2: #{multi_head_attn.1} parent=1 // loop_pre_header
      _
    $region3: #{multi_head_attn.1} parent=1 // loop_header
      %s15 = sphi 0, %s19
      %p16 = scmp.ge.s32.totalorder %s15, 4
      %s25 = sphi 0, %s27
      %s28 = sphi 0, %s25
      %s29 = sphi 0, %s28
      %s45 = sphi 0, %s29
      %s49 = sphi 0, %s49
      %s51 = sphi 0, %s49
      %s52 = sphi 0, %s51
      %s66 = sphi 0, %s52
      %s70 = sphi 0, %s70
      %s72 = sphi 0, %s70
      %s73 = sphi 0, %s72
      %s87 = sphi 0, %s73
      %s91 = sphi 0, %s91
      %s93 = sphi 0, %s91
      %s94 = sphi 0, %s93
      %s108 = sphi 0, %s94
      %s112 = sphi 0, %s112
      %s114 = sphi 0, %s112
      %s115 = sphi 0, %s114
      %s129 = sphi 0, %s115
      %s133 = sphi 0, %s133
      %s135 = sphi 0, %s133
      %s136 = sphi 0, %s135
      %s150 = sphi 0, %s136
      %s156 = sphi 0, %s158
      %s159 = sphi 0, %s156
      %s160 = sphi 0, %s159
      %s176 = sphi 0, %s160
    $region4: #{multi_head_attn.1} parent=1 // loop_header_branch
      %18 = sbr.rel (%p16) target = $region8
    $region5: #{multi_head_attn.1} parent=1 // loop_body
      %s20 = ssub.s32 %s15, 1
      %s21 = ssub.s32 %s15, 2
      %s22 = sadd.s32 %s15, 1
      %s23 = ssub.s32 %s15, %s22
      %p24 = scmp.eq.s32.totalorder %s23, 0
      %s26 = sadd.s32 %s25, 1
      %s27 = scalar_select %p24, %s25, %s26
      %p30 = pneg %p24
      %p31 = scmp.eq.s32.totalorder %s15, 1
      %p32 = por %p30, %p31
      %p33 = scmp.ne.s32.totalorder %s25, %s28
      %p34 = scmp.eq.s32.totalorder %s15, 0
      %p35 = por %p33, %p34
      %p36 = scmp.ne.s32.totalorder %s25, %s28
      %p37 = scmp.eq.s32.totalorder %s20, 1
      %p38 = por %p36, %p37
      %p39 = scmp.ne.s32.totalorder %s28, %s29
      %p40 = scmp.eq.s32.totalorder %s20, 0
      %p41 = por %p39, %p40
      %p42 = scmp.ne.s32.totalorder %s28, %s29
      %p43 = scmp.eq.s32.totalorder %s21, 1
      %p44 = por %p42, %p43
      %p46 = scmp.ne.s32.totalorder %s29, %s45
      %p47 = scmp.eq.s32.totalorder %s21, 0
      %p48 = por %p46, %p47
      %s50 = sadd.s32 %s49, 1
      %p53 = scmp.eq.s32.totalorder %s15, 1
      %p54 = scmp.ne.s32.totalorder %s49, %s51
      %p55 = scmp.eq.s32.totalorder %s15, 0
      %p56 = por %p54, %p55
      %p57 = scmp.ne.s32.totalorder %s49, %s51
      %p58 = scmp.eq.s32.totalorder %s20, 1
      %p59 = por %p57, %p58
      %p60 = scmp.ne.s32.totalorder %s51, %s52
      %p61 = scmp.eq.s32.totalorder %s20, 0
      %p62 = por %p60, %p61
      %p63 = scmp.ne.s32.totalorder %s51, %s52
      %p64 = scmp.eq.s32.totalorder %s21, 1
      %p65 = por %p63, %p64
      %p67 = scmp.ne.s32.totalorder %s52, %s66
      %p68 = scmp.eq.s32.totalorder %s21, 0
      %p69 = por %p67, %p68
      %s71 = sadd.s32 %s70, 1
      %p74 = scmp.eq.s32.totalorder %s15, 1
      %p75 = scmp.ne.s32.totalorder %s70, %s72
      %p76 = scmp.eq.s32.totalorder %s15, 0
      %p77 = por %p75, %p76
      %p78 = scmp.ne.s32.totalorder %s70, %s72
      %p79 = scmp.eq.s32.totalorder %s20, 1
      %p80 = por %p78, %p79
      %p81 = scmp.ne.s32.totalorder %s72, %s73
      %p82 = scmp.eq.s32.totalorder %s20, 0
      %p83 = por %p81, %p82
      %p84 = scmp.ne.s32.totalorder %s72, %s73
      %p85 = scmp.eq.s32.totalorder %s21, 1
      %p86 = por %p84, %p85
      %p88 = scmp.ne.s32.totalorder %s73, %s87
      %p89 = scmp.eq.s32.totalorder %s21, 0
      %p90 = por %p88, %p89
      %s92 = sadd.s32 %s91, 1
      %p95 = scmp.eq.s32.totalorder %s15, 1
      %p96 = scmp.ne.s32.totalorder %s91, %s93
      %p97 = scmp.eq.s32.totalorder %s15, 0
      %p98 = por %p96, %p97
      %p99 = scmp.ne.s32.totalorder %s91, %s93
      %p100 = scmp.eq.s32.totalorder %s20, 1
      %p101 = por %p99, %p100
      %p102 = scmp.ne.s32.totalorder %s93, %s94
      %p103 = scmp.eq.s32.totalorder %s20, 0
      %p104 = por %p102, %p103
      %p105 = scmp.ne.s32.totalorder %s93, %s94
      %p106 = scmp.eq.s32.totalorder %s21, 1
      %p107 = por %p105, %p106
      %p109 = scmp.ne.s32.totalorder %s94, %s108
      %p110 = scmp.eq.s32.totalorder %s21, 0
      %p111 = por %p109, %p110
      %s113 = sadd.s32 %s112, 1
      %p116 = scmp.eq.s32.totalorder %s15, 1
      %p117 = scmp.ne.s32.totalorder %s112, %s114
      %p118 = scmp.eq.s32.totalorder %s15, 0
      %p119 = por %p117, %p118
      %p120 = scmp.ne.s32.totalorder %s112, %s114
      %p121 = scmp.eq.s32.totalorder %s20, 1
      %p122 = por %p120, %p121
      %p123 = scmp.ne.s32.totalorder %s114, %s115
      %p124 = scmp.eq.s32.totalorder %s20, 0
      %p125 = por %p123, %p124
      %p126 = scmp.ne.s32.totalorder %s114, %s115
      %p127 = scmp.eq.s32.totalorder %s21, 1
      %p128 = por %p126, %p127
      %p130 = scmp.ne.s32.totalorder %s115, %s129
      %p131 = scmp.eq.s32.totalorder %s21, 0
      %p132 = por %p130, %p131
      %s134 = sadd.s32 %s133, 1
      %p137 = scmp.eq.s32.totalorder %s15, 1
      %p138 = scmp.ne.s32.totalorder %s133, %s135
      %p139 = scmp.eq.s32.totalorder %s15, 0
      %p140 = por %p138, %p139
      %p141 = scmp.ne.s32.totalorder %s133, %s135
      %p142 = scmp.eq.s32.totalorder %s20, 1
      %p143 = por %p141, %p142
      %p144 = scmp.ne.s32.totalorder %s135, %s136
      %p145 = scmp.eq.s32.totalorder %s20, 0
      %p146 = por %p144, %p145
      %p147 = scmp.ne.s32.totalorder %s135, %s136
      %p148 = scmp.eq.s32.totalorder %s21, 1
      %p149 = por %p147, %p148
      %p151 = scmp.ne.s32.totalorder %s136, %s150
      %p152 = scmp.eq.s32.totalorder %s21, 0
      %p153 = por %p151, %p152
      %s154 = ssub.s32 %s15, %s22
      %p155 = scmp.eq.s32.totalorder %s154, 0
      %s157 = sadd.s32 %s156, 1
      %s158 = scalar_select %p155, %s156, %s157
      %p161 = pneg %p155
      %p162 = scmp.eq.s32.totalorder %s15, 1
      %p163 = por %p161, %p162
      %p164 = scmp.ne.s32.totalorder %s156, %s159
      %p165 = scmp.eq.s32.totalorder %s15, 0
      %p166 = por %p164, %p165
      %p167 = scmp.ne.s32.totalorder %s156, %s159
      %p168 = scmp.eq.s32.totalorder %s20, 1
      %p169 = por %p167, %p168
      %p170 = scmp.ne.s32.totalorder %s159, %s160
      %p171 = scmp.eq.s32.totalorder %s20, 0
      %p172 = por %p170, %p171
      %p173 = scmp.ne.s32.totalorder %s159, %s160
      %p174 = scmp.eq.s32.totalorder %s21, 1
      %p175 = por %p173, %p174
      %p177 = scmp.ne.s32.totalorder %s160, %s176
      %p178 = scmp.eq.s32.totalorder %s21, 0
      %p179 = por %p177, %p178
      %p180 = scmp.le.s32.totalorder 1, %s15
      %p181 = scmp.lt.s32.totalorder %s15, 3
      %p182 = pnand %p180, %p181
      %p183 = pneg %p182
      // Predicated region
      $region9: #{multi_head_attn.1} parent=5 // pred_check
        _
      $region10: #{multi_head_attn.1} parent=5 // pred_check_branch
        %185 = sbr.rel (%p182) target = $region12
      $region11: #{multi_head_attn.1} parent=5 // pred_region
        %s186 = ssub.s32 %s15, 1
        // Predicated region
        $region13: #{multi_head_attn.1} parent=11 // pred_check
          %p187 = pneg %p62
        $region14: #{multi_head_attn.1} parent=11 // pred_check_branch
          %189 = sbr.rel (%p187) target = $region16
        $region15: #{multi_head_attn.1} parent=11 // pred_region
          _
        $region16: #{multi_head_attn.1} parent=11 // pred_fallthru
          _
        // Predicated region
        $region17: #{multi_head_attn.1} parent=11 // pred_check
          %p190 = pneg %p83
        $region18: #{multi_head_attn.1} parent=11 // pred_check_branch
          %192 = sbr.rel (%p190) target = $region20
        $region19: #{multi_head_attn.1} parent=11 // pred_region
          _
        $region20: #{multi_head_attn.1} parent=11 // pred_fallthru
          _
        // Predicated region
        $region21: #{multi_head_attn.1} parent=11 // pred_check
          %p193 = pneg %p104
        $region22: #{multi_head_attn.1} parent=11 // pred_check_branch
          %195 = sbr.rel (%p193) target = $region24
        $region23: #{multi_head_attn.1} parent=11 // pred_region
          _
        $region24: #{multi_head_attn.1} parent=11 // pred_fallthru
          _
        // Predicated region
        $region25: #{multi_head_attn.1} parent=11 // pred_check
          %p196 = pneg %p125
        $region26: #{multi_head_attn.1} parent=11 // pred_check_branch
          %198 = sbr.rel (%p196) target = $region28
        $region27: #{multi_head_attn.1} parent=11 // pred_region
          _
        $region28: #{multi_head_attn.1} parent=11 // pred_fallthru
          _
        // Predicated region
        $region29: #{multi_head_attn.1} parent=11 // pred_check
          %p199 = pneg %p146
        $region30: #{multi_head_attn.1} parent=11 // pred_check_branch
          %201 = sbr.rel (%p199) target = $region32
        $region31: #{multi_head_attn.1} parent=11 // pred_region
          _
        $region32: #{multi_head_attn.1} parent=11 // pred_fallthru
          _
      $region12: #{multi_head_attn.1} parent=5 // pred_fallthru
        _
      %p202 = scmp.lt.s32.totalorder %s15, 2
      // Predicated region
      $region33: #{multi_head_attn.1} parent=5 // pred_check
        %p203 = pneg %p202
      $region34: #{multi_head_attn.1} parent=5 // pred_check_branch
        %205 = sbr.rel (%p203) target = $region36
      $region35: #{multi_head_attn.1} parent=5 // pred_region
        // Predicated region
        $region37: #{multi_head_attn.1} parent=35 // pred_check
          %p206 = pneg %p35
        $region38: #{multi_head_attn.1} parent=35 // pred_check_branch
          %208 = sbr.rel (%p206) target = $region40
        $region39: #{multi_head_attn.1} parent=35 // pred_region
          %p209 = scmp.lt.s32.totalorder %s15, 1
          %s210 = scalar_select %p209, %s15, 1
          %s211 = smul.addr %s210, 8
          %s212 = scalar_lea.vmem %s0, %s211
        $region40: #{multi_head_attn.1} parent=35 // pred_fallthru
          _
      $region36: #{multi_head_attn.1} parent=5 // pred_fallthru
        _
      %p213 = scmp.le.s32.totalorder 1, %s15
      %p214 = scmp.lt.s32.totalorder %s15, 3
      %p215 = pnand %p213, %p214
      %p216 = pneg %p215
      // Predicated region
      $region41: #{multi_head_attn.1} parent=5 // pred_check
        _
      $region42: #{multi_head_attn.1} parent=5 // pred_check_branch
        %218 = sbr.rel (%p215) target = $region44
      $region43: #{multi_head_attn.1} parent=5 // pred_region
        %s219 = ssub.s32 %s15, 1
        %p220 = scmp.lt.s32.totalorder %s20, 1
        %s221 = scalar_select %p220, %s20, 1
        %s222 = smul.addr %s221, 8
        %s223 = scalar_lea.vmem %s0, %s222
        %p224 = pneg %p41
        %p225 = pneg %p38
        %p226 = pneg %p62
        %p227 = pneg %p59
        %p228 = pneg %p83
        %p229 = pneg %p80
        %p230 = pneg %p104
        %p231 = pneg %p101
        %p232 = pneg %p125
        %p233 = pneg %p122
        %p234 = pneg %p146
        %p235 = pneg %p143
        %p236 = pneg %p172
        %p237 = pneg %p169
        %s238 = sand.u32 %s159, 1
        %s239 = scalar_lea.sflag [#allocation3], %s238
        %s240 = sand.u32 %s159, 1
        %s241 = smul.addr %s240, 8
        %s242 = scalar_lea.vmem [#allocation2], %s241
        %p243 = scmp.lt.s32.totalorder %s20, 1
        %s244 = scalar_select %p243, %s20, 1
        %s245 = smul.addr %s244, 8
        %s246 = scalar_lea.vmem %s0, %s245
        %v247 = vld [vmem:[%s246] sm:$0xff]
        %v248 = vld [vmem:[%s4] sm:$0x1]
        %v249 = vld [vmem:[%s5] sm:$0x1]
        %v250 = vld [vmem:[%s1] sm:$0xff]
        %v251 = vld [vmem:[%s1 + $0x8] sm:$0xff]
        %v252 = vld [vmem:[%s1 + $0x10] sm:$0xff]
        %v253 = vld [vmem:[%s1 + $0x18] sm:$0xff]
        %v254 = vld [vmem:[%s2] sm:$0x1]
        %v256 = vlaneseq
        %v257 = vshrl.u32 %v256, 7
        %v258 = vsub.s32 0, %v257
        %v259 = vrot.slane %v254, %v258
        %vm261 = vcmask 261120
        %v263 = vsel %vm261, %v247, 0
        %265 = vmatprep.subr.mxu0 0.0
        %266 = vmatpush1.msra.mxu0 %v250
        %267 = vmatprep.subr.mxu0 0.0
        %268 = vmatpush1.msra.mxu0 %v251
        %269 = vmatprep.subr.mxu0 0.0
        %270 = vmatpush1.msra.mxu0 %v252
        %271 = vmatprep.subr.mxu0 0.0
        %272 = vmatpush1.msra.mxu0 %v253
        %273 = vmatprep.subr.mxu0 0.0
        %274 = vmatpush1.msra.mxu0 0.0
        %275 = vmatprep.subr.mxu0 0.0
        %276 = vmatpush1.msra.mxu0 0.0
        %277 = vmatprep.subr.mxu0 0.0
        %278 = vmatpush1.msra.mxu0 0.0
        %279 = vmatprep.subr.mxu0 0.0
        %280 = vmatpush1.msra.mxu0 0.0
        %281 = vmatprep.subr.mxu0 0.0
        %282 = vmatpush1.msra.mxu0 0.0
        %283 = vmatprep.subr.mxu0 0.0
        %284 = vmatpush1.msra.mxu0 0.0
        %285 = vmatprep.subr.mxu0 0.0
        %286 = vmatpush1.msra.mxu0 0.0
        %287 = vmatprep.subr.mxu0 0.0
        %288 = vmatpush1.msra.mxu0 0.0
        %289 = vmatprep.subr.mxu0 0.0
        %290 = vmatpush1.msra.mxu0 0.0
        %291 = vmatprep.subr.mxu0 0.0
        %292 = vmatpush1.msra.mxu0 0.0
        %293 = vmatprep.subr.mxu0 0.0
        %294 = vmatpush1.msra.mxu0 0.0
        %295 = vmatprep.subr.mxu0 0.0
        %296 = vmatpush1.msra.mxu0 0.0
        %297 = vmatprep.subr.mxu0 0.0
        %298 = vmatpush1.msra.mxu0 0.0
        %299 = vmatprep.subr.mxu0 0.0
        %300 = vmatpush1.msra.mxu0 0.0
        %301 = vmatprep.subr.mxu0 0.0
        %302 = vmatpush1.msra.mxu0 0.0
        %303 = vmatprep.subr.mxu0 0.0
        %304 = vmatpush1.msra.mxu0 0.0
        %305 = vmatprep.subr.mxu0 0.0
        %306 = vmatpush1.msra.mxu0 0.0
        %307 = vmatprep.subr.mxu0 0.0
        %308 = vmatpush1.msra.mxu0 0.0
        %309 = vmatprep.subr.mxu0 0.0
        %310 = vmatpush1.msra.mxu0 0.0
        %311 = vmatprep.subr.mxu0 0.0
        %312 = vmatpush1.msra.mxu0 0.0
        %313 = vmatprep.subr.mxu0 0.0
        %314 = vmatpush1.msra.mxu0 0.0
        %315 = vmatprep.subr.mxu0 0.0
        %316 = vmatpush1.msra.mxu0 0.0
        %317 = vmatprep.subr.mxu0 0.0
        %318 = vmatpush1.msra.mxu0 0.0
        %319 = vmatprep.subr.mxu0 0.0
        %320 = vmatpush1.msra.mxu0 0.0
        %321 = vmatprep.subr.mxu0 0.0
        %322 = vmatpush1.msra.mxu0 0.0
        %323 = vmatprep.subr.mxu0 0.0
        %324 = vmatpush1.msra.mxu0 0.0
        %325 = vmatprep.subr.mxu0 0.0
        %326 = vmatpush1.msra.mxu0 0.0
        %327 = vmatprep.subr.mxu0 0.0
        %328 = vmatpush1.msra.mxu0 0.0
        %329 = vmatprep.mubr.f32.mxu0 0.0
        %330 = vmatmul.mubr.f32.gmra.mrb[0].mxu0 %v263
        %v331 = vpop.f32.mrb[0].mxu0
        %v332 = vadd.f32 %v259, %v331
        %v333 = vpop.f32.mrb[0].mxu0
        %334 = vdwg.mxu0
        %v335 = vld [vmem:[%s3] sm:$0xff]
        %v336 = vld [vmem:[%s3 + $0x8] sm:$0xff]
        %v337 = vld [vmem:[%s3 + $0x10] sm:$0xff]
        %v338 = vld [vmem:[%s3 + $0x18] sm:$0xff]
        %340 = vrot.lane.b32.xlu0 %v332, 96
        %v341 = vpop.permute.xlu0 %340
        %vm342 = vcmask 130048
        %v343 = vsel %vm342, %v332, 0
        %v345 = vsel %vm342, %v341, 0
        %347 = vmatprep.subr.mxu0 0.0
        %348 = vmatpush1.xpose.msra.mxu0 %v345
        %349 = vmatprep.subr.mxu0 0.0
        %350 = vmatpush1.xpose.msra.mxu0 0.0
        %351 = vmatprep.subr.mxu0 0.0
        %352 = vmatpush1.xpose.msra.mxu0 0.0
        %353 = vmatprep.subr.mxu0 0.0
        %354 = vmatpush1.xpose.msra.mxu0 0.0
        %355 = vmatprep.subr.mxu0 0.0
        %356 = vmatpush1.xpose.msra.mxu0 0.0
        %357 = vmatprep.subr.mxu0 0.0
        %358 = vmatpush1.xpose.msra.mxu0 0.0
        %359 = vmatprep.subr.mxu0 0.0
        %360 = vmatpush1.xpose.msra.mxu0 0.0
        %361 = vmatprep.subr.mxu0 0.0
        %362 = vmatpush1.xpose.msra.mxu0 0.0
        %363 = vmatprep.subr.mxu0 0.0
        %364 = vmatpush1.xpose.msra.mxu0 0.0
        %365 = vmatprep.subr.mxu0 0.0
        %366 = vmatpush1.xpose.msra.mxu0 0.0
        %367 = vmatprep.subr.mxu0 0.0
        %368 = vmatpush1.xpose.msra.mxu0 0.0
        %369 = vmatprep.subr.mxu0 0.0
        %370 = vmatpush1.xpose.msra.mxu0 0.0
        %371 = vmatprep.subr.mxu0 0.0
        %372 = vmatpush1.xpose.msra.mxu0 0.0
        %373 = vmatprep.subr.mxu0 0.0
        %374 = vmatpush1.xpose.msra.mxu0 0.0
        %375 = vmatprep.subr.mxu0 0.0
        %376 = vmatpush1.xpose.msra.mxu0 0.0
        %377 = vmatprep.subr.mxu0 0.0
        %378 = vmatpush1.xpose.msra.mxu0 0.0
        %379 = vmatprep.subr.mxu0 0.0
        %380 = vmatpush1.xpose.msra.mxu0 0.0
        %381 = vmatprep.subr.mxu0 0.0
        %382 = vmatpush1.xpose.msra.mxu0 0.0
        %383 = vmatprep.subr.mxu0 0.0
        %384 = vmatpush1.xpose.msra.mxu0 0.0
        %385 = vmatprep.subr.mxu0 0.0
        %386 = vmatpush1.xpose.msra.mxu0 0.0
        %387 = vmatprep.subr.mxu0 0.0
        %388 = vmatpush1.xpose.msra.mxu0 0.0
        %389 = vmatprep.subr.mxu0 0.0
        %390 = vmatpush1.xpose.msra.mxu0 0.0
        %391 = vmatprep.subr.mxu0 0.0
        %392 = vmatpush1.xpose.msra.mxu0 0.0
        %393 = vmatprep.subr.mxu0 0.0
        %394 = vmatpush1.xpose.msra.mxu0 0.0
        %395 = vmatprep.subr.mxu0 0.0
        %396 = vmatpush1.xpose.msra.mxu0 0.0
        %397 = vmatprep.subr.mxu0 0.0
        %398 = vmatpush1.xpose.msra.mxu0 0.0
        %399 = vmatprep.subr.mxu0 0.0
        %400 = vmatpush1.xpose.msra.mxu0 0.0
        %401 = vmatprep.subr.mxu0 0.0
        %402 = vmatpush1.xpose.msra.mxu0 0.0
        %403 = vmatprep.subr.mxu0 0.0
        %404 = vmatpush1.xpose.msra.mxu0 0.0
        %405 = vmatprep.subr.mxu0 0.0
        %406 = vmatpush1.xpose.msra.mxu0 0.0
        %407 = vmatprep.subr.mxu0 0.0
        %408 = vmatpush1.xpose.msra.mxu0 0.0
        %409 = vmatprep.subr.mxu0 0.0
        %410 = vmatpush1.xpose.msra.mxu0 0.0
        %411 = vmatprep.mubr.f32.mxu0 0.0
        %412 = vmatmul.mubr.f32.gmra.mrb[0].mxu0 %v343
        %v413 = vpop.f32.mrb[0].mxu0
        %v414 = vadd.f32 0.0, %v413
        %v415 = vpop.f32.mrb[0].mxu0
        %416 = vdwg.mxu0
        %v417 = vmul.f32 %v414, 0.25
        %vm418 = vcmask 64512
        %v419 = vsel %vm418, %v417, -inf
        %420 = vmax.xlane.f32.xlu0 %v419
        %v421 = vpop.xlane.xlu0 %420
        %v422 = vsub.f32 %v417, %v421
        %v423 = vmul.f32 %v422, 1.442695
        %v424 = vpow.pop %v423
        %v425 = vsel %vm418, %v424, 0.0
        %426 = vadd.xlane.f32.xlu0 %v425
        %v427 = vpop.xlane.xlu0 %426
        %428 = vrot.lane.b32.xlu0 %v332, 64
        %v429 = vpop.permute.xlu0 %428
        %v432 = vsel %vm418, %v424, 0
        %434 = vmatprep.subr.mxu0 0.0
        %435 = vmatpush1.msra.mxu0 %v429
        %436 = vmatprep.subr.mxu0 0.0
        %437 = vmatpush1.msra.mxu0 0.0
        %438 = vmatprep.subr.mxu0 0.0
        %439 = vmatpush1.msra.mxu0 0.0
        %440 = vmatprep.subr.mxu0 0.0
        %441 = vmatpush1.msra.mxu0 0.0
        %442 = vmatprep.subr.mxu0 0.0
        %443 = vmatpush1.msra.mxu0 0.0
        %444 = vmatprep.subr.mxu0 0.0
        %445 = vmatpush1.msra.mxu0 0.0
        %446 = vmatprep.subr.mxu0 0.0
        %447 = vmatpush1.msra.mxu0 0.0
        %448 = vmatprep.subr.mxu0 0.0
        %449 = vmatpush1.msra.mxu0 0.0
        %450 = vmatprep.subr.mxu0 0.0
        %451 = vmatpush1.msra.mxu0 0.0
        %452 = vmatprep.subr.mxu0 0.0
        %453 = vmatpush1.msra.mxu0 0.0
        %454 = vmatprep.subr.mxu0 0.0
        %455 = vmatpush1.msra.mxu0 0.0
        %456 = vmatprep.subr.mxu0 0.0
        %457 = vmatpush1.msra.mxu0 0.0
        %458 = vmatprep.subr.mxu0 0.0
        %459 = vmatpush1.msra.mxu0 0.0
        %460 = vmatprep.subr.mxu0 0.0
        %461 = vmatpush1.msra.mxu0 0.0
        %462 = vmatprep.subr.mxu0 0.0
        %463 = vmatpush1.msra.mxu0 0.0
        %464 = vmatprep.subr.mxu0 0.0
        %465 = vmatpush1.msra.mxu0 0.0
        %466 = vmatprep.subr.mxu0 0.0
        %467 = vmatpush1.msra.mxu0 0.0
        %468 = vmatprep.subr.mxu0 0.0
        %469 = vmatpush1.msra.mxu0 0.0
        %470 = vmatprep.subr.mxu0 0.0
        %471 = vmatpush1.msra.mxu0 0.0
        %472 = vmatprep.subr.mxu0 0.0
        %473 = vmatpush1.msra.mxu0 0.0
        %474 = vmatprep.subr.mxu0 0.0
        %475 = vmatpush1.msra.mxu0 0.0
        %476 = vmatprep.subr.mxu0 0.0
        %477 = vmatpush1.msra.mxu0 0.0
        %478 = vmatprep.subr.mxu0 0.0
        %479 = vmatpush1.msra.mxu0 0.0
        %480 = vmatprep.subr.mxu0 0.0
        %481 = vmatpush1.msra.mxu0 0.0
        %482 = vmatprep.subr.mxu0 0.0
        %483 = vmatpush1.msra.mxu0 0.0
        %484 = vmatprep.subr.mxu0 0.0
        %485 = vmatpush1.msra.mxu0 0.0
        %486 = vmatprep.subr.mxu0 0.0
        %487 = vmatpush1.msra.mxu0 0.0
        %488 = vmatprep.subr.mxu0 0.0
        %489 = vmatpush1.msra.mxu0 0.0
        %490 = vmatprep.subr.mxu0 0.0
        %491 = vmatpush1.msra.mxu0 0.0
        %492 = vmatprep.subr.mxu0 0.0
        %493 = vmatpush1.msra.mxu0 0.0
        %494 = vmatprep.subr.mxu0 0.0
        %495 = vmatpush1.msra.mxu0 0.0
        %496 = vmatprep.subr.mxu0 0.0
        %497 = vmatpush1.msra.mxu0 0.0
        %498 = vmatprep.mubr.f32.mxu0 0.0
        %499 = vmatmul.mubr.f32.gmra.mrb[0].mxu0 %v432
        %v500 = vpop.f32.mrb[0].mxu0
        %v501 = vadd.f32 0.0, %v500
        %v502 = vpop.f32.mrb[0].mxu0
        %503 = vdwg.mxu0
        %v504 = vrcp.pop %v427
        %v505 = vmul.f32 %v501, %v504
        %506 = vrot.lane.b32.xlu0 %v332, 112
        %v507 = vpop.permute.xlu0 %506
        %508 = vrot.lane.b32.xlu0 %v332, 80
        %v509 = vpop.permute.xlu0 %508
        %v510 = vsel %vm342, %v507, 0
        %v512 = vsel %vm342, %v509, 0
        %514 = vmatprep.subr.mxu0 0.0
        %515 = vmatpush1.xpose.msra.mxu0 %v512
        %516 = vmatprep.subr.mxu0 0.0
        %517 = vmatpush1.xpose.msra.mxu0 0.0
        %518 = vmatprep.subr.mxu0 0.0
        %519 = vmatpush1.xpose.msra.mxu0 0.0
        %520 = vmatprep.subr.mxu0 0.0
        %521 = vmatpush1.xpose.msra.mxu0 0.0
        %522 = vmatprep.subr.mxu0 0.0
        %523 = vmatpush1.xpose.msra.mxu0 0.0
        %524 = vmatprep.subr.mxu0 0.0
        %525 = vmatpush1.xpose.msra.mxu0 0.0
        %526 = vmatprep.subr.mxu0 0.0
        %527 = vmatpush1.xpose.msra.mxu0 0.0
        %528 = vmatprep.subr.mxu0 0.0
        %529 = vmatpush1.xpose.msra.mxu0 0.0
        %530 = vmatprep.subr.mxu0 0.0
        %531 = vmatpush1.xpose.msra.mxu0 0.0
        %532 = vmatprep.subr.mxu0 0.0
        %533 = vmatpush1.xpose.msra.mxu0 0.0
        %534 = vmatprep.subr.mxu0 0.0
        %535 = vmatpush1.xpose.msra.mxu0 0.0
        %536 = vmatprep.subr.mxu0 0.0
        %537 = vmatpush1.xpose.msra.mxu0 0.0
        %538 = vmatprep.subr.mxu0 0.0
        %539 = vmatpush1.xpose.msra.mxu0 0.0
        %540 = vmatprep.subr.mxu0 0.0
        %541 = vmatpush1.xpose.msra.mxu0 0.0
        %542 = vmatprep.subr.mxu0 0.0
        %543 = vmatpush1.xpose.msra.mxu0 0.0
        %544 = vmatprep.subr.mxu0 0.0
        %545 = vmatpush1.xpose.msra.mxu0 0.0
        %546 = vmatprep.subr.mxu0 0.0
        %547 = vmatpush1.xpose.msra.mxu0 0.0
        %548 = vmatprep.subr.mxu0 0.0
        %549 = vmatpush1.xpose.msra.mxu0 0.0
        %550 = vmatprep.subr.mxu0 0.0
        %551 = vmatpush1.xpose.msra.mxu0 0.0
        %552 = vmatprep.subr.mxu0 0.0
        %553 = vmatpush1.xpose.msra.mxu0 0.0
        %554 = vmatprep.subr.mxu0 0.0
        %555 = vmatpush1.xpose.msra.mxu0 0.0
        %556 = vmatprep.subr.mxu0 0.0
        %557 = vmatpush1.xpose.msra.mxu0 0.0
        %558 = vmatprep.subr.mxu0 0.0
        %559 = vmatpush1.xpose.msra.mxu0 0.0
        %560 = vmatprep.subr.mxu0 0.0
        %561 = vmatpush1.xpose.msra.mxu0 0.0
        %562 = vmatprep.subr.mxu0 0.0
        %563 = vmatpush1.xpose.msra.mxu0 0.0
        %564 = vmatprep.subr.mxu0 0.0
        %565 = vmatpush1.xpose.msra.mxu0 0.0
        %566 = vmatprep.subr.mxu0 0.0
        %567 = vmatpush1.xpose.msra.mxu0 0.0
        %568 = vmatprep.subr.mxu0 0.0
        %569 = vmatpush1.xpose.msra.mxu0 0.0
        %570 = vmatprep.subr.mxu0 0.0
        %571 = vmatpush1.xpose.msra.mxu0 0.0
        %572 = vmatprep.subr.mxu0 0.0
        %573 = vmatpush1.xpose.msra.mxu0 0.0
        %574 = vmatprep.subr.mxu0 0.0
        %575 = vmatpush1.xpose.msra.mxu0 0.0
        %576 = vmatprep.subr.mxu0 0.0
        %577 = vmatpush1.xpose.msra.mxu0 0.0
        %578 = vmatprep.mubr.f32.mxu0 0.0
        %579 = vmatmul.mubr.f32.gmra.mrb[0].mxu0 %v510
        %v580 = vpop.f32.mrb[0].mxu0
        %v581 = vadd.f32 0.0, %v580
        %v582 = vpop.f32.mrb[0].mxu0
        %583 = vdwg.mxu0
        %v584 = vmul.f32 %v581, 0.25
        %v585 = vsel %vm418, %v584, -inf
        %586 = vmax.xlane.f32.xlu0 %v585
        %v587 = vpop.xlane.xlu0 %586
        %v588 = vsub.f32 %v584, %v587
        %v589 = vmul.f32 %v588, 1.442695
        %v590 = vpow.pop %v589
        %v591 = vsel %vm418, %v590, 0.0
        %592 = vadd.xlane.f32.xlu0 %v591
        %v593 = vpop.xlane.xlu0 %592
        %594 = vrot.lane.b32.xlu0 %v332, 48
        %v595 = vpop.permute.xlu0 %594
        %v598 = vsel %vm418, %v590, 0
        %600 = vmatprep.subr.mxu0 0.0
        %601 = vmatpush1.msra.mxu0 %v595
        %602 = vmatprep.subr.mxu0 0.0
        %603 = vmatpush1.msra.mxu0 0.0
        %604 = vmatprep.subr.mxu0 0.0
        %605 = vmatpush1.msra.mxu0 0.0
        %606 = vmatprep.subr.mxu0 0.0
        %607 = vmatpush1.msra.mxu0 0.0
        %608 = vmatprep.subr.mxu0 0.0
        %609 = vmatpush1.msra.mxu0 0.0
        %610 = vmatprep.subr.mxu0 0.0
        %611 = vmatpush1.msra.mxu0 0.0
        %612 = vmatprep.subr.mxu0 0.0
        %613 = vmatpush1.msra.mxu0 0.0
        %614 = vmatprep.subr.mxu0 0.0
        %615 = vmatpush1.msra.mxu0 0.0
        %616 = vmatprep.subr.mxu0 0.0
        %617 = vmatpush1.msra.mxu0 0.0
        %618 = vmatprep.subr.mxu0 0.0
        %619 = vmatpush1.msra.mxu0 0.0
        %620 = vmatprep.subr.mxu0 0.0
        %621 = vmatpush1.msra.mxu0 0.0
        %622 = vmatprep.subr.mxu0 0.0
        %623 = vmatpush1.msra.mxu0 0.0
        %624 = vmatprep.subr.mxu0 0.0
        %625 = vmatpush1.msra.mxu0 0.0
        %626 = vmatprep.subr.mxu0 0.0
        %627 = vmatpush1.msra.mxu0 0.0
        %628 = vmatprep.subr.mxu0 0.0
        %629 = vmatpush1.msra.mxu0 0.0
        %630 = vmatprep.subr.mxu0 0.0
        %631 = vmatpush1.msra.mxu0 0.0
        %632 = vmatprep.subr.mxu0 0.0
        %633 = vmatpush1.msra.mxu0 0.0
        %634 = vmatprep.subr.mxu0 0.0
        %635 = vmatpush1.msra.mxu0 0.0
        %636 = vmatprep.subr.mxu0 0.0
        %637 = vmatpush1.msra.mxu0 0.0
        %638 = vmatprep.subr.mxu0 0.0
        %639 = vmatpush1.msra.mxu0 0.0
        %640 = vmatprep.subr.mxu0 0.0
        %641 = vmatpush1.msra.mxu0 0.0
        %642 = vmatprep.subr.mxu0 0.0
        %643 = vmatpush1.msra.mxu0 0.0
        %644 = vmatprep.subr.mxu0 0.0
        %645 = vmatpush1.msra.mxu0 0.0
        %646 = vmatprep.subr.mxu0 0.0
        %647 = vmatpush1.msra.mxu0 0.0
        %648 = vmatprep.subr.mxu0 0.0
        %649 = vmatpush1.msra.mxu0 0.0
        %650 = vmatprep.subr.mxu0 0.0
        %651 = vmatpush1.msra.mxu0 0.0
        %652 = vmatprep.subr.mxu0 0.0
        %653 = vmatpush1.msra.mxu0 0.0
        %654 = vmatprep.subr.mxu0 0.0
        %655 = vmatpush1.msra.mxu0 0.0
        %656 = vmatprep.subr.mxu0 0.0
        %657 = vmatpush1.msra.mxu0 0.0
        %658 = vmatprep.subr.mxu0 0.0
        %659 = vmatpush1.msra.mxu0 0.0
        %660 = vmatprep.subr.mxu0 0.0
        %661 = vmatpush1.msra.mxu0 0.0
        %662 = vmatprep.subr.mxu0 0.0
        %663 = vmatpush1.msra.mxu0 0.0
        %664 = vmatprep.mubr.f32.mxu0 0.0
        %665 = vmatmul.mubr.f32.gmra.mrb[0].mxu0 %v598
        %v666 = vpop.f32.mrb[0].mxu0
        %v667 = vadd.f32 0.0, %v666
        %v668 = vpop.f32.mrb[0].mxu0
        %669 = vdwg.mxu0
        %v670 = vrcp.pop %v593
        %v671 = vmul.f32 %v667, %v670
        %673 = vrot.lane.b32.xlu0 %v671, 16
        %v674 = vpop.permute.xlu0 %673
        %v676 = vsel %vm342, %v505, %v674
        %v678 = vsel %vm261, %v676, 0
        %680 = vmatprep.subr.mxu0 0.0
        %681 = vmatpush1.msra.mxu0 %v335
        %682 = vmatprep.subr.mxu0 0.0
        %683 = vmatpush1.msra.mxu0 %v336
        %684 = vmatprep.subr.mxu0 0.0
        %685 = vmatpush1.msra.mxu0 %v337
        %686 = vmatprep.subr.mxu0 0.0
        %687 = vmatpush1.msra.mxu0 %v338
        %688 = vmatprep.subr.mxu0 0.0
        %689 = vmatpush1.msra.mxu0 0.0
        %690 = vmatprep.subr.mxu0 0.0
        %691 = vmatpush1.msra.mxu0 0.0
        %692 = vmatprep.subr.mxu0 0.0
        %693 = vmatpush1.msra.mxu0 0.0
        %694 = vmatprep.subr.mxu0 0.0
        %695 = vmatpush1.msra.mxu0 0.0
        %696 = vmatprep.subr.mxu0 0.0
        %697 = vmatpush1.msra.mxu0 0.0
        %698 = vmatprep.subr.mxu0 0.0
        %699 = vmatpush1.msra.mxu0 0.0
        %700 = vmatprep.subr.mxu0 0.0
        %701 = vmatpush1.msra.mxu0 0.0
        %702 = vmatprep.subr.mxu0 0.0
        %703 = vmatpush1.msra.mxu0 0.0
        %704 = vmatprep.subr.mxu0 0.0
        %705 = vmatpush1.msra.mxu0 0.0
        %706 = vmatprep.subr.mxu0 0.0
        %707 = vmatpush1.msra.mxu0 0.0
        %708 = vmatprep.subr.mxu0 0.0
        %709 = vmatpush1.msra.mxu0 0.0
        %710 = vmatprep.subr.mxu0 0.0
        %711 = vmatpush1.msra.mxu0 0.0
        %712 = vmatprep.subr.mxu0 0.0
        %713 = vmatpush1.msra.mxu0 0.0
        %714 = vmatprep.subr.mxu0 0.0
        %715 = vmatpush1.msra.mxu0 0.0
        %716 = vmatprep.subr.mxu0 0.0
        %717 = vmatpush1.msra.mxu0 0.0
        %718 = vmatprep.subr.mxu0 0.0
        %719 = vmatpush1.msra.mxu0 0.0
        %720 = vmatprep.subr.mxu0 0.0
        %721 = vmatpush1.msra.mxu0 0.0
        %722 = vmatprep.subr.mxu0 0.0
        %723 = vmatpush1.msra.mxu0 0.0
        %724 = vmatprep.subr.mxu0 0.0
        %725 = vmatpush1.msra.mxu0 0.0
        %726 = vmatprep.subr.mxu0 0.0
        %727 = vmatpush1.msra.mxu0 0.0
        %728 = vmatprep.subr.mxu0 0.0
        %729 = vmatpush1.msra.mxu0 0.0
        %730 = vmatprep.subr.mxu0 0.0
        %731 = vmatpush1.msra.mxu0 0.0
        %732 = vmatprep.subr.mxu0 0.0
        %733 = vmatpush1.msra.mxu0 0.0
        %734 = vmatprep.subr.mxu0 0.0
        %735 = vmatpush1.msra.mxu0 0.0
        %736 = vmatprep.subr.mxu0 0.0
        %737 = vmatpush1.msra.mxu0 0.0
        %738 = vmatprep.subr.mxu0 0.0
        %739 = vmatpush1.msra.mxu0 0.0
        %740 = vmatprep.subr.mxu0 0.0
        %741 = vmatpush1.msra.mxu0 0.0
        %742 = vmatprep.subr.mxu0 0.0
        %743 = vmatpush1.msra.mxu0 0.0
        %744 = vmatprep.mubr.f32.mxu0 0.0
        %745 = vmatmul.mubr.f32.gmra.mrb[0].mxu0 %v678
        %v746 = vpop.f32.mrb[0].mxu0
        %v747 = vadd.f32 0.0, %v746
        %v748 = vpop.f32.mrb[0].mxu0
        %749 = vdwg.mxu0
        %v750 = vadd.f32 %v247, %v747
        %v751 = vsel %vm261, %v750, 0.0
        %752 = vadd.xlane.f32.xlu0 %v751
        %v753 = vpop.xlane.xlu0 %752
        %v754 = vrcp.pop 32.0
        %v755 = vmul.f32 %v753, %v754
        %v756 = vsub.f32 %v750, %v755
        %v757 = vmul.f32 %v756, %v756
        %v758 = vsel %vm261, %v757, 0.0
        %759 = vadd.xlane.f32.xlu0 %v758
        %v760 = vpop.xlane.xlu0 %759
        %v761 = vmul.f32 %v760, %v754
        %v762 = vadd.f32 %v761, 1e-05
        %v763 = vrsqrt.pop %v762
        %v764 = vmul.f32 %v756, %v763
        %v766 = vlaneseq
        %v767 = vshrl.u32 %v766, 7
        %v768 = vsub.s32 0, %v767
        %v769 = vrot.slane %v248, %v768
        %v771 = vmul.f32 %v764, %v769
        %v773 = vlaneseq
        %v774 = vshrl.u32 %v773, 7
        %v775 = vsub.s32 0, %v774
        %v776 = vrot.slane %v249, %v775
        %v778 = vadd.f32 %v771, %v776
        %779 = vst.msk [vmem:[%s242] sm:$0xff] %vm261, %v778
        %s780 = sand.u32 %s159, 1
        %s781 = scalar_lea.sflag [#allocation3], %s780
        %s782 = sand.u32 %s159, 1
        %s783 = smul.addr %s782, 8
        %s784 = scalar_lea.vmem [#allocation2], %s783
        // Predicated region
        $region45: #{multi_head_attn.1} parent=43 // pred_check
          %p785 = pneg %p169
        $region46: #{multi_head_attn.1} parent=43 // pred_check_branch
          %787 = sbr.rel (%p785) target = $region48
        $region47: #{multi_head_attn.1} parent=43 // pred_region
          %s789 = ssub.s32 128, 128
          %790 = vsyncadd %s781, %s789
          %s791 = smul.addr %s20, 128
          %s792 = scalar_lea.hbm %s6, %s791
          %s794 = sshll.u32 %s784, 4
          %s795 = int_to_ptr.vmem [resolvable:$true] %s794
          %797 = dma.vmem_to_hbm [thread:$0]  %s795, 128, %s792, %s781
        $region48: #{multi_head_attn.1} parent=43 // pred_fallthru
          _
      $region44: #{multi_head_attn.1} parent=5 // pred_fallthru
        _
      %p798 = scmp.le.s32.totalorder 2, %s15
      // Predicated region
      $region49: #{multi_head_attn.1} parent=5 // pred_check
        %p799 = pneg %p798
      $region50: #{multi_head_attn.1} parent=5 // pred_check_branch
        %801 = sbr.rel (%p799) target = $region52
      $region51: #{multi_head_attn.1} parent=5 // pred_region
        %s802 = ssub.s32 %s15, 2
        // Predicated region
        $region53: #{multi_head_attn.1} parent=51 // pred_check
          %p803 = pneg %p175
        $region54: #{multi_head_attn.1} parent=51 // pred_check_branch
          %805 = sbr.rel (%p803) target = $region56
        $region55: #{multi_head_attn.1} parent=51 // pred_region
          %s806 = sand.u32 %s160, 1
          %s807 = scalar_lea.sflag [#allocation3], %s806
          %s808 = sand.u32 %s160, 1
          %s809 = smul.addr %s808, 8
          %s810 = scalar_lea.vmem [#allocation2], %s809
          %811 = dma.done %s807, 128
        $region56: #{multi_head_attn.1} parent=51 // pred_fallthru
          _
      $region52: #{multi_head_attn.1} parent=5 // pred_fallthru
        _
    $region6: #{multi_head_attn.1} parent=1 // loop_footer
      %s19 = sadd.s32 1, %s15
    $region7: #{multi_head_attn.1} parent=1 // loop_footer_branch
      %14 = sbr.rel target = $region3
    $region8: #{multi_head_attn.1} parent=1 // loop_exit
      _
    %812 = vsyncpa [#allocation3], 1
    %s813 = scalar_lea.sflag [#allocation3], 1
    %814 = vsyncpa %s813, 1

</llo_original>
